<compile_context>
chip_gen: v6e
topology: v6e:2x2x1
jax: 0.10.0
libtpu: 0.0.40
codegen_flags: <defaults>
</compile_context>

<pallas_src>
import functools

import jax
import jax.numpy as jnp
from jax.experimental import pallas as pl
from jax.experimental.pallas import tpu as pltpu

IN_CH = 3
WIDTHS = (8, 16, 32)   # synthetic backbone stage widths
LANES = 128            # lane-dense Cout / K padding for stages 2-3
K1_PAD = 16            # stage-1 K = 2*2*3 = 12 real values, padded to 16


# ----------------------------------------------------------------------------
# Pallas kernel (built per static `emit` tuple = which stages are returned).
#
# Activation row order ("bit-interleaved"): the row index of a stage output
# at spatial position (h, w) has bits (h&1, w&1, (h>>1)&1, (w>>1)&1, ...)
# from MSB to LSB.  With this order the four 2x2/stride-2 taps consumed by
# the next stage are the four contiguous quarter blocks of the row axis, and
# every stage's matmul produces its output directly in the same order.
# ----------------------------------------------------------------------------
def _make_kernel(emit):
    e0, e1, e2 = emit

    def kernel(p1_ref, w1_ref, b1_ref, w2_ref, b2_ref, w3_ref, b3_ref, *refs):
        acc2_ref, y2_ref = refs[-2], refs[-1]
        out_it = iter(refs[:-2])
        o1_ref = next(out_it) if e0 else None
        o2_ref = next(out_it) if e1 else None
        o3_ref = next(out_it) if e2 else None

        f32 = jnp.float32
        t = pl.program_id(1)                     # which stage-2 tap / quarter

        # ---- stage 1 on this quarter of the rows (compact K = 16 lanes) ----
        y1 = jnp.dot(p1_ref[0], w1_ref[...], preferred_element_type=f32)
        y1 = jnp.maximum(y1 + b1_ref[...], 0.0)          # f32 bias + ReLU
        y1_bf = y1.astype(jnp.bfloat16)                  # cast exactly once
        if e0:
            o1_ref[0] = y1_bf                            # bf16, lane-dense 128

        if e1 or e2:
            # ---- stage 2: accumulate this tap into the VMEM accumulator ----
            contrib = jnp.dot(y1_bf, w2_ref[0], preferred_element_type=f32)

            @pl.when(t == 0)
            def _():
                acc2_ref[...] = b2_ref[...] + contrib    # bias-initialized

            @pl.when(t != 0)
            def _():
                acc2_ref[...] = acc2_ref[...] + contrib

            # ---- last tap: finalize stage 2, run stage 3 --------------------
            @pl.when(t == pl.num_programs(1) - 1)
            def _():
                y2_bf = jnp.maximum(acc2_ref[...], 0.0).astype(jnp.bfloat16)
                y2_ref[...] = y2_bf
                if e1:
                    o2_ref[0] = y2_bf
                if e2:
                    m3 = y2_ref.shape[0] // 4
                    # Tap row-blocks are re-read from the bf16 scratch at
                    # 4-row offsets (sublane-aligned under bf16 packing)
                    # rather than sliced out of the register value mid-tile.
                    # Full-resolution variants should keep m3 % 8 == 0.
                    acc3 = b3_ref[...] + jnp.dot(
                        y2_ref[0:m3, :], w3_ref[0], preferred_element_type=f32)
                    for q in range(1, 4):
                        acc3 = acc3 + jnp.dot(
                            y2_ref[q * m3:(q + 1) * m3, :], w3_ref[q],
                            preferred_element_type=f32)
                    o3_ref[0] = jnp.maximum(acc3, 0.0).astype(jnp.bfloat16)

    return kernel


# ----------------------------------------------------------------------------
# Layout helpers (thin XLA glue around the single pallas_call).
# ----------------------------------------------------------------------------
def build_stage1_patches(x_nhwc, k_pad=K1_PAD):
    """(B, H, W, C) f32 -> (B, (H/2)*(W/2), k_pad) bf16 patch matrix with rows
    in bit-interleaved order; K = (kh, kw, c) padded only to 16 lanes."""
    B, H, W, C = x_nhwc.shape
    n = H.bit_length() - 1
    assert H == W and (1 << n) == H and H >= 16, \
        "demo backbone expects square power-of-two inputs, H = W >= 16"
    x = x_nhwc.reshape((B,) + (2,) * n + (2,) * n + (C,))
    ax_h = lambda j: 1 + (n - 1 - j)          # axis holding bit j of h
    ax_w = lambda j: 1 + n + (n - 1 - j)      # axis holding bit j of w
    perm = [0]
    for j in range(1, n):                     # row bits: (h1, w1, h2, w2, ...)
        perm += [ax_h(j), ax_w(j)]
    perm += [ax_h(0), ax_w(0), 1 + 2 * n]     # K bits: (kh, kw, c)
    x = jnp.transpose(x, perm)
    m1 = 1 << (2 * (n - 1))
    p = x.reshape(B, m1, 4 * C)
    p = jnp.pad(p, ((0, 0), (0, 0), (0, k_pad - 4 * C)))
    return p.astype(jnp.bfloat16)


def decode_rows_to_nchw(rows, cout):
    """(B, 4**m, 128) bit-interleaved bf16 rows -> (B, cout, 2**m, 2**m) f32.
    Bit-deinterleave and NHWC->NCHW fused into one jnp.transpose."""
    B, M, _ = rows.shape
    m = (M.bit_length() - 1) // 2
    r = rows[..., :cout].astype(jnp.float32)
    r = r.reshape((B,) + (2,) * (2 * m) + (cout,))
    perm = ([0, 1 + 2 * m]                                  # batch, channel
            + [1 + 2 * j for j in reversed(range(m))]       # h bits MSB..LSB
            + [2 + 2 * j for j in reversed(range(m))])      # w bits MSB..LSB
    r = jnp.transpose(r, perm)
    return r.reshape(B, cout, 1 << m, 1 << m)


# ----------------------------------------------------------------------------
# Synthetic backbone parameters + lane-dense packing for the kernel.
# ----------------------------------------------------------------------------
def make_backbone_params(key, in_ch=IN_CH, widths=WIDTHS):
    params = []
    cin = in_ch
    for cout in widths:
        key, kw, kb = jax.random.split(key, 3)
        w = jax.random.normal(kw, (4 * cin, cout), jnp.float32) * 0.1
        b = jax.random.normal(kb, (cout,), jnp.float32) * 0.01
        params.append((w, b))
        cin = cout
    return params


def pack_params_for_kernel(params):
    """bf16 weights: stage 1 K padded to 16, stages 2/3 split per 2x2 tap into
    (4, 128, 128) stacks (K padded to the 128 activation lanes).  f32 biases
    padded to (1, 128)."""
    (w1, b1), (w2, b2), (w3, b3) = params
    c1, c2 = w1.shape[1], w2.shape[1]

    def pad_w(w, k_pad):
        out = jnp.zeros((k_pad, LANES), jnp.float32)
        return out.at[:w.shape[0], :w.shape[1]].set(w).astype(jnp.bfloat16)

    def pad_taps(w, cin):
        return jnp.stack([pad_w(w[t * cin:(t + 1) * cin], LANES)
                          for t in range(4)])

    def pad_bias(b):
        return jnp.zeros((1, LANES), jnp.float32).at[0, :b.shape[0]].set(b)

    return dict(w1=pad_w(w1, K1_PAD), b1=pad_bias(b1),
                w2=pad_taps(w2, c1), b2=pad_bias(b2),
                w3=pad_taps(w3, c2), b3=pad_bias(b3))


# ----------------------------------------------------------------------------
# Fused backbone body: one pallas_call, grid = (batch, stage-2 tap).
# ----------------------------------------------------------------------------
def _backbone_features(packed, x_nchw, *, emit):
    e0, e1, e2 = emit
    B = x_nchw.shape[0]
    x_nhwc = jnp.transpose(x_nchw, (0, 2, 3, 1))
    p1 = build_stage1_patches(x_nhwc)                 # (B, M1, 16) bf16
    M1, KP = p1.shape[1], p1.shape[2]
    M2, M3 = M1 // 4, M1 // 16

    out_shapes, out_specs, stages = [], [], []
    if e0:
        out_shapes.append(jax.ShapeDtypeStruct((B, M1, LANES), jnp.bfloat16))
        out_specs.append(pl.BlockSpec((1, M2, LANES), lambda b, t: (b, t, 0)))
        stages.append(0)
    if e1:
        out_shapes.append(jax.ShapeDtypeStruct((B, M2, LANES), jnp.bfloat16))
        out_specs.append(pl.BlockSpec((1, M2, LANES), lambda b, t: (b, 0, 0)))
        stages.append(1)
    if e2:
        out_shapes.append(jax.ShapeDtypeStruct((B, M3, LANES), jnp.bfloat16))
        out_specs.append(pl.BlockSpec((1, M3, LANES), lambda b, t: (b, 0, 0)))
        stages.append(2)

    flops = 2 * B * (M1 * KP * LANES + M1 * LANES * LANES
                     + 4 * M3 * LANES * LANES)
    out_bytes = sum(2 * B * LANES * m
                    for m, e in zip((M1, M2, M3), emit) if e)
    bytes_accessed = (p1.size * 2
                      + (packed["w1"].size + packed["w2"].size
                         + packed["w3"].size) * 2
                      + (packed["b1"].size + packed["b2"].size
                         + packed["b3"].size) * 4
                      + out_bytes)

    grid_spec = pltpu.PrefetchScalarGridSpec(
        num_scalar_prefetch=0,
        grid=(B, 4),
        in_specs=[
            pl.BlockSpec((1, M2, KP), lambda b, t: (b, t, 0)),       # patches
            pl.BlockSpec((KP, LANES), lambda b, t: (0, 0)),          # w1
            pl.BlockSpec((1, LANES), lambda b, t: (0, 0)),           # b1
            pl.BlockSpec((1, LANES, LANES), lambda b, t: (t, 0, 0)), # w2 tap t
            pl.BlockSpec((1, LANES), lambda b, t: (0, 0)),           # b2
            pl.BlockSpec((4, LANES, LANES), lambda b, t: (0, 0, 0)), # w3 taps
            pl.BlockSpec((1, LANES), lambda b, t: (0, 0)),           # b3
        ],
        out_specs=tuple(out_specs),
        scratch_shapes=[pltpu.VMEM((M2, LANES), jnp.float32),   # stage-2 acc
                        pltpu.VMEM((M2, LANES), jnp.bfloat16)], # stage-2 act
    )

    outs = pl.pallas_call(
        _make_kernel(emit),
        out_shape=tuple(out_shapes),
        grid_spec=grid_spec,
        compiler_params=pltpu.CompilerParams(
            dimension_semantics=("parallel", "arbitrary"),  # batch sharded on v7x
            vmem_limit_bytes=32 * 1024 * 1024,
        ),
        cost_estimate=pl.CostEstimate(
            flops=flops, transcendentals=0, bytes_accessed=bytes_accessed),
    )(p1, packed["w1"], packed["b1"], packed["w2"], packed["b2"],
      packed["w3"], packed["b3"])
    if not isinstance(outs, (tuple, list)):
        outs = (outs,)

    feats = {}
    for stage_idx, o in zip(stages, outs):
        feats[str(stage_idx)] = decode_rows_to_nchw(o, WIDTHS[stage_idx])
    return feats


# ----------------------------------------------------------------------------
# F.interpolate(mode='nearest') equivalent for the mask resize.
# ----------------------------------------------------------------------------
def interpolate_nearest(mask, out_h, out_w):
    """mask: (B, 1, H, W) float -> (B, 1, out_h, out_w); torch 'nearest' rule
    src = floor(dst * in / out).  Strided slice when the ratio is integer."""
    B, C, H, W = mask.shape
    if H % out_h == 0 and W % out_w == 0:
        return mask[:, :, ::H // out_h, ::W // out_w]
    hi = (jnp.arange(out_h) * H) // out_h
    wi = (jnp.arange(out_w) * W) // out_w
    return mask[:, :, hi][:, :, :, wi]


# ----------------------------------------------------------------------------
# BackboneBase forward (matches the PyTorch module's semantics)
# ----------------------------------------------------------------------------
class BackboneBase:
    def __init__(self, params, return_interm_indices, num_channels, export=False):
        self.packed = pack_params_for_kernel(params)
        self.return_interm_indices = list(return_interm_indices)
        self.num_channels = num_channels
        self.export = export
        emit = tuple(i in self.return_interm_indices for i in range(3))
        self._features = jax.jit(functools.partial(_backbone_features, emit=emit))

    def __call__(self, input_tensors):
        # input_tensors: (B, 4, H, W) NCHW (RGB + padding-mask channel)
        if self.export:
            b, _, h, w = input_tensors.shape
            masks = jnp.zeros((b, 1, h, w), input_tensors.dtype)
            input_tensor = input_tensors
        else:
            masks = input_tensors[:, 3:4]
            input_tensor = input_tensors[:, :3]

        feats = self._features(self.packed, input_tensor)
        xs = [feats[str(i)] for i in self.return_interm_indices]
        if isinstance(xs, list):
            xs = {f"layer{i}": x for i, x in enumerate(xs)}

        out = {}
        for name, x in xs.items():
            m = interpolate_nearest(masks.astype(jnp.float32),
                                    x.shape[-2], x.shape[-1])
            out[name] = (x, m.astype(jnp.bool_))
        return out


# ----------------------------------------------------------------------------
# Pure-JAX reference of the same synthetic backbone (bf16-rounded matmul
# inputs, f32 accumulate/bias/ReLU) for a numerical cross-check.
# ----------------------------------------------------------------------------
def reference_backbone(params, x_nchw):
    def r(v):
        return v.astype(jnp.bfloat16).astype(jnp.float32)

    x = jnp.transpose(x_nchw, (0, 2, 3, 1))
    feats = []
    for (w, b) in params:
        B, H, W, Cin = x.shape
        Ho, Wo = H // 2, W // 2
        p = x.reshape(B, Ho, 2, Wo, 2, Cin).transpose(0, 1, 3, 2, 4, 5)
        p = p.reshape(B, Ho * Wo, 4 * Cin)
        y = jnp.einsum("bmk,kn->bmn", r(p), r(w),
                       precision=jax.lax.Precision.HIGHEST) + b
        y = jnp.maximum(y, 0.0)
        x = y.reshape(B, Ho, Wo, -1)
        feats.append(jnp.transpose(x, (0, 3, 1, 2)))
    return feats


# ----------------------------------------------------------------------------
if __name__ == "__main__":
    key = jax.random.PRNGKey(0)
    k_img, k_msk, k_par = jax.random.split(key, 3)

    B, H, W = 2, 16, 16
    rgb = jax.random.normal(k_img, (B, 3, H, W), jnp.float32)
    # padding-style mask channel (0/1), concatenated as channel 3
    mask_ch = (jax.random.uniform(k_msk, (B, 1, H, W)) > 0.5).astype(jnp.float32)
    x = jnp.concatenate([rgb, mask_ch], axis=1)          # (2, 4, 16, 16)

    params = make_backbone_params(k_par, in_ch=IN_CH, widths=WIDTHS)
    model = BackboneBase(params, return_interm_indices=[0, 1, 2],
                         num_channels=32, export=False)

    out = model(x)
    for leaf in jax.tree_util.tree_leaves(out):
        jax.block_until_ready(leaf)

    # sanity on shapes/dtypes
    assert out["layer0"][0].shape == (B, 8, 8, 8)
    assert out["layer1"][0].shape == (B, 16, 4, 4)
    assert out["layer2"][0].shape == (B, 32, 2, 2)
    assert out["layer0"][1].shape == (B, 1, 8, 8) and out["layer0"][1].dtype == jnp.bool_
    assert out["layer2"][1].shape == (B, 1, 2, 2) and out["layer2"][1].dtype == jnp.bool_

    # numerics vs the pure-JAX reference (kernel outputs are bf16-rounded,
    # hence the looser tolerance per the review).
    feats_ref = reference_backbone(params, rgb)
    for i in range(3):
        got = out[f"layer{i}"][0]
        ref = feats_ref[i]
        assert bool(jnp.allclose(got, ref, atol=1e-2, rtol=1e-2)), f"layer{i} mismatch"

    # mask nearest-resize matches the floor(dst*in/out) rule
    assert bool(jnp.array_equal(out["layer0"][1],
                                mask_ch[:, :, ::2, ::2].astype(jnp.bool_)))

    print("KERNEL_OK")
</pallas_src>

<mosaic_0001>
module attributes {stable_mosaic.version = 11 : i64} {
  func.func @kernel(%arg0: i32, %arg1: i32, %arg2: memref<1x16x16xbf16, #tpu.memory_space<vmem>>, %arg3: memref<16x128xbf16, #tpu.memory_space<vmem>>, %arg4: memref<1x128xf32, #tpu.memory_space<vmem>>, %arg5: memref<1x128x128xbf16, #tpu.memory_space<vmem>>, %arg6: memref<1x128xf32, #tpu.memory_space<vmem>>, %arg7: memref<4x128x128xbf16, #tpu.memory_space<vmem>>, %arg8: memref<1x128xf32, #tpu.memory_space<vmem>>, %arg9: memref<1x16x128xbf16, #tpu.memory_space<vmem>>, %arg10: memref<1x16x128xbf16, #tpu.memory_space<vmem>>, %arg11: memref<1x4x128xbf16, #tpu.memory_space<vmem>>, %arg12: memref<16x128xf32, #tpu.memory_space<vmem>>, %arg13: memref<16x128xbf16, #tpu.memory_space<vmem>>) attributes {dimension_semantics = [#tpu.dimension_semantics<parallel>, #tpu.dimension_semantics<arbitrary>], iteration_bounds = array<i64: 2, 4>, scalar_prefetch = 0 : i64, scratch_operands = 2 : i64, tpu.core_type = #tpu.core_type<tc>, window_params = [{transform_indices = @transform_0, window_bounds = array<i64: 1, 16, 16>}, {pipeline_mode = #tpu.pipeline_mode<synchronous>, transform_indices = @transform_1, window_bounds = array<i64: 16, 128>}, {pipeline_mode = #tpu.pipeline_mode<synchronous>, transform_indices = @transform_2, window_bounds = array<i64: 1, 128>}, {transform_indices = @transform_3, window_bounds = array<i64: 1, 128, 128>}, {pipeline_mode = #tpu.pipeline_mode<synchronous>, transform_indices = @transform_4, window_bounds = array<i64: 1, 128>}, {pipeline_mode = #tpu.pipeline_mode<synchronous>, transform_indices = @transform_5, window_bounds = array<i64: 4, 128, 128>}, {pipeline_mode = #tpu.pipeline_mode<synchronous>, transform_indices = @transform_6, window_bounds = array<i64: 1, 128>}, {transform_indices = @transform_7, window_bounds = array<i64: 1, 16, 128>}, {transform_indices = @transform_8, window_bounds = array<i64: 1, 16, 128>}, {transform_indices = @transform_9, window_bounds = array<i64: 1, 4, 128>}]} {
    %c0 = arith.constant 0 : index
    %c0_0 = arith.constant 0 : index
    %c0_1 = arith.constant 0 : index
    %0 = vector.load %arg2[%c0, %c0_0, %c0_1] : memref<1x16x16xbf16, #tpu.memory_space<vmem>>, vector<1x16x16xbf16>
    %1 = vector.shape_cast %0 : vector<1x16x16xbf16> to vector<16x16xbf16>
    %c0_2 = arith.constant 0 : index
    %c0_3 = arith.constant 0 : index
    %2 = vector.load %arg3[%c0_2, %c0_3] : memref<16x128xbf16, #tpu.memory_space<vmem>>, vector<16x128xbf16>
    %cst = arith.constant dense<0.000000e+00> : vector<16x128xf32>
    %3 = tpu.matmul %1, %2, %cst {dimension_numbers = #tpu.dot_dimension_numbers<[1], [0], [0], [1], [0, 0, 1, 1], [], []>} : vector<16x16xbf16>, vector<16x128xbf16>, vector<16x128xf32> -> vector<16x128xf32>
    %c0_4 = arith.constant 0 : index
    %c0_5 = arith.constant 0 : index
    %4 = vector.load %arg4[%c0_4, %c0_5] : memref<1x128xf32, #tpu.memory_space<vmem>>, vector<1x128xf32>
    %5 = vector.broadcast %4 : vector<1x128xf32> to vector<16x128xf32>
    %6 = arith.addf %3, %5 : vector<16x128xf32>
    %cst_6 = arith.constant 0.000000e+00 : f32
    %7 = vector.broadcast %cst_6 : f32 to vector<16x128xf32>
    %8 = arith.maximumf %6, %7 : vector<16x128xf32>
    %9 = arith.truncf %8 : vector<16x128xf32> to vector<16x128xbf16>
    %c0_7 = arith.constant 0 : index
    %c0_8 = arith.constant 0 : index
    %c0_9 = arith.constant 0 : index
    %10 = vector.load %arg9[%c0_7, %c0_8, %c0_9] : memref<1x16x128xbf16, #tpu.memory_space<vmem>>, vector<1x16x128xbf16>
    %11 = vector.shape_cast %10 : vector<1x16x128xbf16> to vector<16x128xbf16>
    %12 = vector.shape_cast %9 : vector<16x128xbf16> to vector<1x16x128xbf16>
    tpu.vector_store %arg9[%c0_7, %c0_8, %c0_9], %12 {strides = array<i32>} : memref<1x16x128xbf16, #tpu.memory_space<vmem>>, vector<1x16x128xbf16>,
    %c0_10 = arith.constant 0 : index
    %c0_11 = arith.constant 0 : index
    %c0_12 = arith.constant 0 : index
    %13 = vector.load %arg5[%c0_10, %c0_11, %c0_12] : memref<1x128x128xbf16, #tpu.memory_space<vmem>>, vector<1x128x128xbf16>
    %14 = vector.shape_cast %13 : vector<1x128x128xbf16> to vector<128x128xbf16>
    %cst_13 = arith.constant dense<0.000000e+00> : vector<16x128xf32>
    %15 = tpu.matmul %9, %14, %cst_13 {dimension_numbers = #tpu.dot_dimension_numbers<[1], [0], [0], [1], [0, 0, 1, 1], [], []>} : vector<16x128xbf16>, vector<128x128xbf16>, vector<16x128xf32> -> vector<16x128xf32>
    %c0_i32 = arith.constant 0 : i32
    %16 = arith.cmpi eq, %arg1, %c0_i32 : i32
    %17 = arith.extui %16 : i1 to i32
    %c0_i32_14 = arith.constant 0 : i32
    %18 = arith.cmpi ne, %17, %c0_i32_14 : i32
    scf.if %18 {
      %c0_18 = arith.constant 0 : index
      %c0_19 = arith.constant 0 : index
      %25 = vector.load %arg6[%c0_18, %c0_19] : memref<1x128xf32, #tpu.memory_space<vmem>>, vector<1x128xf32>
      %26 = vector.broadcast %25 : vector<1x128xf32> to vector<16x128xf32>
      %27 = arith.addf %26, %15 : vector<16x128xf32>
      %c0_20 = arith.constant 0 : index
      %c0_21 = arith.constant 0 : index
      %28 = vector.load %arg12[%c0_20, %c0_21] : memref<16x128xf32, #tpu.memory_space<vmem>>, vector<16x128xf32>
      tpu.vector_store %arg12[%c0_20, %c0_21], %27 {strides = array<i32>} : memref<16x128xf32, #tpu.memory_space<vmem>>, vector<16x128xf32>,
    } else {
    }
    %c0_i32_15 = arith.constant 0 : i32
    %19 = arith.cmpi ne, %arg1, %c0_i32_15 : i32
    %20 = arith.extui %19 : i1 to i32
    %c0_i32_16 = arith.constant 0 : i32
    %21 = arith.cmpi ne, %20, %c0_i32_16 : i32
    scf.if %21 {
      %c0_18 = arith.constant 0 : index
      %c0_19 = arith.constant 0 : index
      %25 = vector.load %arg12[%c0_18, %c0_19] : memref<16x128xf32, #tpu.memory_space<vmem>>, vector<16x128xf32>
      %26 = arith.addf %25, %15 : vector<16x128xf32>
      %c0_20 = arith.constant 0 : index
      %c0_21 = arith.constant 0 : index
      %27 = vector.load %arg12[%c0_20, %c0_21] : memref<16x128xf32, #tpu.memory_space<vmem>>, vector<16x128xf32>
      tpu.vector_store %arg12[%c0_20, %c0_21], %26 {strides = array<i32>} : memref<16x128xf32, #tpu.memory_space<vmem>>, vector<16x128xf32>,
    } else {
    }
    %c3_i32 = arith.constant 3 : i32
    %22 = arith.cmpi eq, %arg1, %c3_i32 : i32
    %23 = arith.extui %22 : i1 to i32
    %c0_i32_17 = arith.constant 0 : i32
    %24 = arith.cmpi ne, %23, %c0_i32_17 : i32
    scf.if %24 {
      %c0_18 = arith.constant 0 : index
      %c0_19 = arith.constant 0 : index
      %25 = vector.load %arg12[%c0_18, %c0_19] : memref<16x128xf32, #tpu.memory_space<vmem>>, vector<16x128xf32>
      %cst_20 = arith.constant 0.000000e+00 : f32
      %26 = vector.broadcast %cst_20 : f32 to vector<16x128xf32>
      %27 = arith.maximumf %25, %26 : vector<16x128xf32>
      %28 = arith.truncf %27 : vector<16x128xf32> to vector<16x128xbf16>
      %c0_21 = arith.constant 0 : index
      %c0_22 = arith.constant 0 : index
      %29 = vector.load %arg13[%c0_21, %c0_22] : memref<16x128xbf16, #tpu.memory_space<vmem>>, vector<16x128xbf16>
      tpu.vector_store %arg13[%c0_21, %c0_22], %28 {strides = array<i32>} : memref<16x128xbf16, #tpu.memory_space<vmem>>, vector<16x128xbf16>,
      %c0_23 = arith.constant 0 : index
      %c0_24 = arith.constant 0 : index
      %c0_25 = arith.constant 0 : index
      %30 = vector.load %arg10[%c0_23, %c0_24, %c0_25] : memref<1x16x128xbf16, #tpu.memory_space<vmem>>, vector<1x16x128xbf16>
      %31 = vector.shape_cast %30 : vector<1x16x128xbf16> to vector<16x128xbf16>
      %32 = vector.shape_cast %28 : vector<16x128xbf16> to vector<1x16x128xbf16>
      tpu.vector_store %arg10[%c0_23, %c0_24, %c0_25], %32 {strides = array<i32>} : memref<1x16x128xbf16, #tpu.memory_space<vmem>>, vector<1x16x128xbf16>,
      %c0_26 = arith.constant 0 : index
      %c0_27 = arith.constant 0 : index
      %33 = vector.load %arg8[%c0_26, %c0_27] : memref<1x128xf32, #tpu.memory_space<vmem>>, vector<1x128xf32>
      %c0_28 = arith.constant 0 : index
      %c0_29 = arith.constant 0 : index
      %34 = vector.load %arg13[%c0_28, %c0_29] : memref<16x128xbf16, #tpu.memory_space<vmem>>, vector<4x128xbf16>
      %c0_30 = arith.constant 0 : index
      %c0_31 = arith.constant 0 : index
      %c0_32 = arith.constant 0 : index
      %35 = vector.load %arg7[%c0_30, %c0_31, %c0_32] : memref<4x128x128xbf16, #tpu.memory_space<vmem>>, vector<1x128x128xbf16>
      %36 = vector.shape_cast %35 : vector<1x128x128xbf16> to vector<128x128xbf16>
      %cst_33 = arith.constant dense<0.000000e+00> : vector<4x128xf32>
      %37 = tpu.matmul %34, %36, %cst_33 {dimension_numbers = #tpu.dot_dimension_numbers<[1], [0], [0], [1], [0, 0, 1, 1], [], []>} : vector<4x128xbf16>, vector<128x128xbf16>, vector<4x128xf32> -> vector<4x128xf32>
      %38 = vector.broadcast %33 : vector<1x128xf32> to vector<4x128xf32>
      %39 = arith.addf %38, %37 : vector<4x128xf32>
      %c4 = arith.constant 4 : index
      %c0_34 = arith.constant 0 : index
      %40 = vector.load %arg13[%c4, %c0_34] : memref<16x128xbf16, #tpu.memory_space<vmem>>, vector<4x128xbf16>
      %c1 = arith.constant 1 : index
      %c0_35 = arith.constant 0 : index
      %c0_36 = arith.constant 0 : index
      %41 = vector.load %arg7[%c1, %c0_35, %c0_36] : memref<4x128x128xbf16, #tpu.memory_space<vmem>>, vector<1x128x128xbf16>
      %42 = vector.shape_cast %41 : vector<1x128x128xbf16> to vector<128x128xbf16>
      %cst_37 = arith.constant dense<0.000000e+00> : vector<4x128xf32>
      %43 = tpu.matmul %40, %42, %cst_37 {dimension_numbers = #tpu.dot_dimension_numbers<[1], [0], [0], [1], [0, 0, 1, 1], [], []>} : vector<4x128xbf16>, vector<128x128xbf16>, vector<4x128xf32> -> vector<4x128xf32>
      %44 = arith.addf %39, %43 : vector<4x128xf32>
      %c8 = arith.constant 8 : index
      %c0_38 = arith.constant 0 : index
      %45 = vector.load %arg13[%c8, %c0_38] : memref<16x128xbf16, #tpu.memory_space<vmem>>, vector<4x128xbf16>
      %c2 = arith.constant 2 : index
      %c0_39 = arith.constant 0 : index
      %c0_40 = arith.constant 0 : index
      %46 = vector.load %arg7[%c2, %c0_39, %c0_40] : memref<4x128x128xbf16, #tpu.memory_space<vmem>>, vector<1x128x128xbf16>
      %47 = vector.shape_cast %46 : vector<1x128x128xbf16> to vector<128x128xbf16>
      %cst_41 = arith.constant dense<0.000000e+00> : vector<4x128xf32>
      %48 = tpu.matmul %45, %47, %cst_41 {dimension_numbers = #tpu.dot_dimension_numbers<[1], [0], [0], [1], [0, 0, 1, 1], [], []>} : vector<4x128xbf16>, vector<128x128xbf16>, vector<4x128xf32> -> vector<4x128xf32>
      %49 = arith.addf %44, %48 : vector<4x128xf32>
      %c12 = arith.constant 12 : index
      %c0_42 = arith.constant 0 : index
      %50 = vector.load %arg13[%c12, %c0_42] : memref<16x128xbf16, #tpu.memory_space<vmem>>, vector<4x128xbf16>
      %c3 = arith.constant 3 : index
      %c0_43 = arith.constant 0 : index
      %c0_44 = arith.constant 0 : index
      %51 = vector.load %arg7[%c3, %c0_43, %c0_44] : memref<4x128x128xbf16, #tpu.memory_space<vmem>>, vector<1x128x128xbf16>
      %52 = vector.shape_cast %51 : vector<1x128x128xbf16> to vector<128x128xbf16>
      %cst_45 = arith.constant dense<0.000000e+00> : vector<4x128xf32>
      %53 = tpu.matmul %50, %52, %cst_45 {dimension_numbers = #tpu.dot_dimension_numbers<[1], [0], [0], [1], [0, 0, 1, 1], [], []>} : vector<4x128xbf16>, vector<128x128xbf16>, vector<4x128xf32> -> vector<4x128xf32>
      %54 = arith.addf %49, %53 : vector<4x128xf32>
      %cst_46 = arith.constant 0.000000e+00 : f32
      %55 = vector.broadcast %cst_46 : f32 to vector<4x128xf32>
      %56 = arith.maximumf %54, %55 : vector<4x128xf32>
      %57 = arith.truncf %56 : vector<4x128xf32> to vector<4x128xbf16>
      %c0_47 = arith.constant 0 : index
      %c0_48 = arith.constant 0 : index
      %c0_49 = arith.constant 0 : index
      %58 = vector.load %arg11[%c0_47, %c0_48, %c0_49] : memref<1x4x128xbf16, #tpu.memory_space<vmem>>, vector<1x4x128xbf16>
      %59 = vector.shape_cast %58 : vector<1x4x128xbf16> to vector<4x128xbf16>
      %60 = vector.shape_cast %57 : vector<4x128xbf16> to vector<1x4x128xbf16>
      tpu.vector_store %arg11[%c0_47, %c0_48, %c0_49], %60 {strides = array<i32>} : memref<1x4x128xbf16, #tpu.memory_space<vmem>>, vector<1x4x128xbf16>,
    } else {
    }
    return
  }
  func.func @transform_0(%arg0: i32, %arg1: i32) -> (i32, i32, i32) {
    %c0_i32 = arith.constant 0 : i32
    %c0_i32_0 = arith.constant 0 : i32
    return %arg0, %arg1, %c0_i32 : i32, i32, i32
  }
  func.func @transform_1(%arg0: i32, %arg1: i32) -> (i32, i32) {
    %c0_i32 = arith.constant 0 : i32
    %c0_i32_0 = arith.constant 0 : i32
    %c0_i32_1 = arith.constant 0 : i32
    return %c0_i32, %c0_i32_0 : i32, i32
  }
  func.func @transform_2(%arg0: i32, %arg1: i32) -> (i32, i32) {
    %c0_i32 = arith.constant 0 : i32
    %c0_i32_0 = arith.constant 0 : i32
    %c0_i32_1 = arith.constant 0 : i32
    return %c0_i32, %c0_i32_0 : i32, i32
  }
  func.func @transform_3(%arg0: i32, %arg1: i32) -> (i32, i32, i32) {
    %c0_i32 = arith.constant 0 : i32
    %c0_i32_0 = arith.constant 0 : i32
    %c0_i32_1 = arith.constant 0 : i32
    return %arg1, %c0_i32, %c0_i32_0 : i32, i32, i32
  }
  func.func @transform_4(%arg0: i32, %arg1: i32) -> (i32, i32) {
    %c0_i32 = arith.constant 0 : i32
    %c0_i32_0 = arith.constant 0 : i32
    %c0_i32_1 = arith.constant 0 : i32
    return %c0_i32, %c0_i32_0 : i32, i32
  }
  func.func @transform_5(%arg0: i32, %arg1: i32) -> (i32, i32, i32) {
    %c0_i32 = arith.constant 0 : i32
    %c0_i32_0 = arith.constant 0 : i32
    %c0_i32_1 = arith.constant 0 : i32
    %c0_i32_2 = arith.constant 0 : i32
    return %c0_i32, %c0_i32_0, %c0_i32_1 : i32, i32, i32
  }
  func.func @transform_6(%arg0: i32, %arg1: i32) -> (i32, i32) {
    %c0_i32 = arith.constant 0 : i32
    %c0_i32_0 = arith.constant 0 : i32
    %c0_i32_1 = arith.constant 0 : i32
    return %c0_i32, %c0_i32_0 : i32, i32
  }
  func.func @transform_7(%arg0: i32, %arg1: i32) -> (i32, i32, i32) {
    %c0_i32 = arith.constant 0 : i32
    %c0_i32_0 = arith.constant 0 : i32
    return %arg0, %arg1, %c0_i32 : i32, i32, i32
  }
  func.func @transform_8(%arg0: i32, %arg1: i32) -> (i32, i32, i32) {
    %c0_i32 = arith.constant 0 : i32
    %c0_i32_0 = arith.constant 0 : i32
    %c0_i32_1 = arith.constant 0 : i32
    return %arg0, %c0_i32, %c0_i32_0 : i32, i32, i32
  }
  func.func @transform_9(%arg0: i32, %arg1: i32) -> (i32, i32, i32) {
    %c0_i32 = arith.constant 0 : i32
    %c0_i32_0 = arith.constant 0 : i32
    %c0_i32_1 = arith.constant 0 : i32
    return %arg0, %c0_i32, %c0_i32_0 : i32, i32, i32
  }
}

</mosaic_0001>

<llo_original>
// kernel: _backbone_features.1
$region0: #{_backbone_features.1}
  #allocation0 [shape = 'u32[]', space=smem, size = 0x4, offset = 0x4, fixed_abs, tag = 'smem constant byte address 0x4 - core index']
  #allocation1 [shape = 'u32[144,128]{1,0:T(1,128)}', space=vmem, size = 0x12000, scoped, tag = 'internal scratch']
  #allocation2 [shape = 'f32[16,128]{1,0:T(8,128)}', space=vmem, size = 0x2000, scoped, tag = 'scratch operand']
  #allocation3 [shape = 'bf16[16,128]{1,0:T(8,128)(2,1)}', space=vmem, size = 0x1000, scoped, tag = 'scratch operand']
  %s0 = inlined_call_operand.vmem [shape: bf16[2,64,16], index: 0, kind: input, shape index: {}]
  %s1 = inlined_call_operand.vmem [shape: bf16[16,128], index: 1, kind: input, shape index: {}]
  %s2 = inlined_call_operand.vmem [shape: f32[1,128], index: 2, kind: input, shape index: {}]
  %s3 = inlined_call_operand.vmem [shape: bf16[4,128,128], index: 3, kind: input, shape index: {}]
  %s4 = inlined_call_operand.vmem [shape: f32[1,128], index: 4, kind: input, shape index: {}]
  %s5 = inlined_call_operand.vmem [shape: bf16[4,128,128], index: 5, kind: input, shape index: {}]
  %s6 = inlined_call_operand.vmem [shape: f32[1,128], index: 6, kind: input, shape index: {}]
  %s7 = inlined_call_operand.vmem [shape: bf16[2,64,128], index: 7, kind: output, shape index: {0}]
  %s8 = inlined_call_operand.vmem [shape: bf16[2,16,128], index: 8, kind: output, shape index: {1}]
  %s9 = inlined_call_operand.vmem [shape: bf16[2,4,128], index: 9, kind: output, shape index: {2}]
  %10 = xla_tuple %s7, %s8, %s9
  %s11 = sld [smem:[#allocation0]]
  $region89: #{_backbone_features.1} parent=0
    _
  %s13 = ssub.s32 1, %s11
  %s14 = scalar_select 0, %s13, %s11
  loop: start=0, step=1, limit=10
  $region2: #{_backbone_features.1} parent=0 // loop_pre_header
    _
  $region3: #{_backbone_features.1} parent=0 // loop_header
    %s16 = sphi 0, %s20
    %p17 = scmp.ge.s32.totalorder %s16, 10
    %s23 = sphi 0, %s35
    %s24 = sphi 0, %s31
    %s25 = sphi 0, %s23
    %s26 = sphi 0, %s24
    %s27 = sphi 0, %s25
    %s28 = sphi 0, %s26
    %s40 = sphi 0, %s42
    %s43 = sphi 0, %s40
    %s44 = sphi 0, %s43
    %s60 = sphi 0, %s44
    %s64 = sphi 0, %s64
    %s66 = sphi 0, %s64
    %s67 = sphi 0, %s66
    %s81 = sphi 0, %s67
    %s85 = sphi 0, %s85
    %s87 = sphi 0, %s85
    %s88 = sphi 0, %s87
    %s102 = sphi 0, %s88
    %s108 = sphi 0, %s110
    %s111 = sphi 0, %s108
    %s112 = sphi 0, %s111
    %s128 = sphi 0, %s112
    %s132 = sphi 0, %s132
    %s134 = sphi 0, %s132
    %s135 = sphi 0, %s134
    %s149 = sphi 0, %s135
    %s153 = sphi 0, %s153
    %s155 = sphi 0, %s153
    %s156 = sphi 0, %s155
    %s170 = sphi 0, %s156
    %s174 = sphi 0, %s174
    %s176 = sphi 0, %s174
    %s177 = sphi 0, %s176
    %s191 = sphi 0, %s177
    %s199 = sphi 0, %s201
    %s202 = sphi 0, %s199
    %s203 = sphi 0, %s202
    %s219 = sphi 0, %s203
    %s225 = sphi 0, %s227
    %s228 = sphi 0, %s225
    %s229 = sphi 0, %s228
    %s245 = sphi 0, %s229
    %s251 = sphi 0, %s253
    %s254 = sphi 0, %s251
    %s255 = sphi 0, %s254
    %s271 = sphi 0, %s255
  $region4: #{_backbone_features.1} parent=0 // loop_header_branch
    %19 = sbr.rel (%p17) target = $region8
  $region5: #{_backbone_features.1} parent=0 // loop_body
    %s21 = ssub.s32 %s16, 1
    %s22 = ssub.s32 %s16, 2
    %s29 = sadd.s32 1, %s24
    %p30 = scmp.ge.s32.totalorder %s29, 4
    %s31 = scalar_select %p30, 0, %s29
    %s32 = sadd.s32 1, %s23
    %s33 = scalar_select %p30, %s32, %s23
    %p34 = scmp.ge.s32.totalorder %s33, 2
    %s35 = scalar_select %p34, 0, %s33
    %s36 = ssub.s32 %s23, %s35
    %s37 = ssub.s32 %s24, %s31
    %s38 = sor.u32 %s36, %s37
    %p39 = scmp.eq.s32.totalorder %s38, 0
    %s41 = sadd.s32 %s40, 1
    %s42 = scalar_select %p39, %s40, %s41
    %p45 = pneg %p39
    %p46 = scmp.eq.s32.totalorder %s16, 7
    %p47 = por %p45, %p46
    %p48 = scmp.ne.s32.totalorder %s40, %s43
    %p49 = scmp.eq.s32.totalorder %s16, 0
    %p50 = por %p48, %p49
    %p51 = scmp.ne.s32.totalorder %s40, %s43
    %p52 = scmp.eq.s32.totalorder %s21, 7
    %p53 = por %p51, %p52
    %p54 = scmp.ne.s32.totalorder %s43, %s44
    %p55 = scmp.eq.s32.totalorder %s21, 0
    %p56 = por %p54, %p55
    %p57 = scmp.ne.s32.totalorder %s43, %s44
    %p58 = scmp.eq.s32.totalorder %s22, 7
    %p59 = por %p57, %p58
    %p61 = scmp.ne.s32.totalorder %s44, %s60
    %p62 = scmp.eq.s32.totalorder %s22, 0
    %p63 = por %p61, %p62
    %s65 = sadd.s32 %s64, 1
    %p68 = scmp.eq.s32.totalorder %s16, 7
    %p69 = scmp.ne.s32.totalorder %s64, %s66
    %p70 = scmp.eq.s32.totalorder %s16, 0
    %p71 = por %p69, %p70
    %p72 = scmp.ne.s32.totalorder %s64, %s66
    %p73 = scmp.eq.s32.totalorder %s21, 7
    %p74 = por %p72, %p73
    %p75 = scmp.ne.s32.totalorder %s66, %s67
    %p76 = scmp.eq.s32.totalorder %s21, 0
    %p77 = por %p75, %p76
    %p78 = scmp.ne.s32.totalorder %s66, %s67
    %p79 = scmp.eq.s32.totalorder %s22, 7
    %p80 = por %p78, %p79
    %p82 = scmp.ne.s32.totalorder %s67, %s81
    %p83 = scmp.eq.s32.totalorder %s22, 0
    %p84 = por %p82, %p83
    %s86 = sadd.s32 %s85, 1
    %p89 = scmp.eq.s32.totalorder %s16, 7
    %p90 = scmp.ne.s32.totalorder %s85, %s87
    %p91 = scmp.eq.s32.totalorder %s16, 0
    %p92 = por %p90, %p91
    %p93 = scmp.ne.s32.totalorder %s85, %s87
    %p94 = scmp.eq.s32.totalorder %s21, 7
    %p95 = por %p93, %p94
    %p96 = scmp.ne.s32.totalorder %s87, %s88
    %p97 = scmp.eq.s32.totalorder %s21, 0
    %p98 = por %p96, %p97
    %p99 = scmp.ne.s32.totalorder %s87, %s88
    %p100 = scmp.eq.s32.totalorder %s22, 7
    %p101 = por %p99, %p100
    %p103 = scmp.ne.s32.totalorder %s88, %s102
    %p104 = scmp.eq.s32.totalorder %s22, 0
    %p105 = por %p103, %p104
    %s106 = ssub.s32 %s24, %s31
    %p107 = scmp.eq.s32.totalorder %s106, 0
    %s109 = sadd.s32 %s108, 1
    %s110 = scalar_select %p107, %s108, %s109
    %p113 = pneg %p107
    %p114 = scmp.eq.s32.totalorder %s16, 7
    %p115 = por %p113, %p114
    %p116 = scmp.ne.s32.totalorder %s108, %s111
    %p117 = scmp.eq.s32.totalorder %s16, 0
    %p118 = por %p116, %p117
    %p119 = scmp.ne.s32.totalorder %s108, %s111
    %p120 = scmp.eq.s32.totalorder %s21, 7
    %p121 = por %p119, %p120
    %p122 = scmp.ne.s32.totalorder %s111, %s112
    %p123 = scmp.eq.s32.totalorder %s21, 0
    %p124 = por %p122, %p123
    %p125 = scmp.ne.s32.totalorder %s111, %s112
    %p126 = scmp.eq.s32.totalorder %s22, 7
    %p127 = por %p125, %p126
    %p129 = scmp.ne.s32.totalorder %s112, %s128
    %p130 = scmp.eq.s32.totalorder %s22, 0
    %p131 = por %p129, %p130
    %s133 = sadd.s32 %s132, 1
    %p136 = scmp.eq.s32.totalorder %s16, 7
    %p137 = scmp.ne.s32.totalorder %s132, %s134
    %p138 = scmp.eq.s32.totalorder %s16, 0
    %p139 = por %p137, %p138
    %p140 = scmp.ne.s32.totalorder %s132, %s134
    %p141 = scmp.eq.s32.totalorder %s21, 7
    %p142 = por %p140, %p141
    %p143 = scmp.ne.s32.totalorder %s134, %s135
    %p144 = scmp.eq.s32.totalorder %s21, 0
    %p145 = por %p143, %p144
    %p146 = scmp.ne.s32.totalorder %s134, %s135
    %p147 = scmp.eq.s32.totalorder %s22, 7
    %p148 = por %p146, %p147
    %p150 = scmp.ne.s32.totalorder %s135, %s149
    %p151 = scmp.eq.s32.totalorder %s22, 0
    %p152 = por %p150, %p151
    %s154 = sadd.s32 %s153, 1
    %p157 = scmp.eq.s32.totalorder %s16, 7
    %p158 = scmp.ne.s32.totalorder %s153, %s155
    %p159 = scmp.eq.s32.totalorder %s16, 0
    %p160 = por %p158, %p159
    %p161 = scmp.ne.s32.totalorder %s153, %s155
    %p162 = scmp.eq.s32.totalorder %s21, 7
    %p163 = por %p161, %p162
    %p164 = scmp.ne.s32.totalorder %s155, %s156
    %p165 = scmp.eq.s32.totalorder %s21, 0
    %p166 = por %p164, %p165
    %p167 = scmp.ne.s32.totalorder %s155, %s156
    %p168 = scmp.eq.s32.totalorder %s22, 7
    %p169 = por %p167, %p168
    %p171 = scmp.ne.s32.totalorder %s156, %s170
    %p172 = scmp.eq.s32.totalorder %s22, 0
    %p173 = por %p171, %p172
    %s175 = sadd.s32 %s174, 1
    %p178 = scmp.eq.s32.totalorder %s16, 7
    %p179 = scmp.ne.s32.totalorder %s174, %s176
    %p180 = scmp.eq.s32.totalorder %s16, 0
    %p181 = por %p179, %p180
    %p182 = scmp.ne.s32.totalorder %s174, %s176
    %p183 = scmp.eq.s32.totalorder %s21, 7
    %p184 = por %p182, %p183
    %p185 = scmp.ne.s32.totalorder %s176, %s177
    %p186 = scmp.eq.s32.totalorder %s21, 0
    %p187 = por %p185, %p186
    %p188 = scmp.ne.s32.totalorder %s176, %s177
    %p189 = scmp.eq.s32.totalorder %s22, 7
    %p190 = por %p188, %p189
    %p192 = scmp.ne.s32.totalorder %s177, %s191
    %p193 = scmp.eq.s32.totalorder %s22, 0
    %p194 = por %p192, %p193
    %s195 = ssub.s32 %s23, %s35
    %s196 = ssub.s32 %s24, %s31
    %s197 = sor.u32 %s195, %s196
    %p198 = scmp.eq.s32.totalorder %s197, 0
    %s200 = sadd.s32 %s199, 1
    %s201 = scalar_select %p198, %s199, %s200
    %p204 = pneg %p198
    %p205 = scmp.eq.s32.totalorder %s16, 7
    %p206 = por %p204, %p205
    %p207 = scmp.ne.s32.totalorder %s199, %s202
    %p208 = scmp.eq.s32.totalorder %s16, 0
    %p209 = por %p207, %p208
    %p210 = scmp.ne.s32.totalorder %s199, %s202
    %p211 = scmp.eq.s32.totalorder %s21, 7
    %p212 = por %p210, %p211
    %p213 = scmp.ne.s32.totalorder %s202, %s203
    %p214 = scmp.eq.s32.totalorder %s21, 0
    %p215 = por %p213, %p214
    %p216 = scmp.ne.s32.totalorder %s202, %s203
    %p217 = scmp.eq.s32.totalorder %s22, 7
    %p218 = por %p216, %p217
    %p220 = scmp.ne.s32.totalorder %s203, %s219
    %p221 = scmp.eq.s32.totalorder %s22, 0
    %p222 = por %p220, %p221
    %s223 = ssub.s32 %s23, %s35
    %p224 = scmp.eq.s32.totalorder %s223, 0
    %s226 = sadd.s32 %s225, 1
    %s227 = scalar_select %p224, %s225, %s226
    %p230 = pneg %p224
    %p231 = scmp.eq.s32.totalorder %s16, 7
    %p232 = por %p230, %p231
    %p233 = scmp.ne.s32.totalorder %s225, %s228
    %p234 = scmp.eq.s32.totalorder %s16, 0
    %p235 = por %p233, %p234
    %p236 = scmp.ne.s32.totalorder %s225, %s228
    %p237 = scmp.eq.s32.totalorder %s21, 7
    %p238 = por %p236, %p237
    %p239 = scmp.ne.s32.totalorder %s228, %s229
    %p240 = scmp.eq.s32.totalorder %s21, 0
    %p241 = por %p239, %p240
    %p242 = scmp.ne.s32.totalorder %s228, %s229
    %p243 = scmp.eq.s32.totalorder %s22, 7
    %p244 = por %p242, %p243
    %p246 = scmp.ne.s32.totalorder %s229, %s245
    %p247 = scmp.eq.s32.totalorder %s22, 0
    %p248 = por %p246, %p247
    %s249 = ssub.s32 %s23, %s35
    %p250 = scmp.eq.s32.totalorder %s249, 0
    %s252 = sadd.s32 %s251, 1
    %s253 = scalar_select %p250, %s251, %s252
    %p256 = pneg %p250
    %p257 = scmp.eq.s32.totalorder %s16, 7
    %p258 = por %p256, %p257
    %p259 = scmp.ne.s32.totalorder %s251, %s254
    %p260 = scmp.eq.s32.totalorder %s16, 0
    %p261 = por %p259, %p260
    %p262 = scmp.ne.s32.totalorder %s251, %s254
    %p263 = scmp.eq.s32.totalorder %s21, 7
    %p264 = por %p262, %p263
    %p265 = scmp.ne.s32.totalorder %s254, %s255
    %p266 = scmp.eq.s32.totalorder %s21, 0
    %p267 = por %p265, %p266
    %p268 = scmp.ne.s32.totalorder %s254, %s255
    %p269 = scmp.eq.s32.totalorder %s22, 7
    %p270 = por %p268, %p269
    %p272 = scmp.ne.s32.totalorder %s255, %s271
    %p273 = scmp.eq.s32.totalorder %s22, 0
    %p274 = por %p272, %p273
    %p275 = scmp.le.s32.totalorder 1, %s16
    %p276 = scmp.lt.s32.totalorder %s16, 9
    %p277 = pnand %p275, %p276
    %p278 = pneg %p277
    // Predicated region
    $region9: #{_backbone_features.1} parent=5 // pred_check
      _
    $region10: #{_backbone_features.1} parent=5 // pred_check_branch
      %280 = sbr.rel (%p277) target = $region12
    $region11: #{_backbone_features.1} parent=5 // pred_region
      %s281 = ssub.s32 %s16, 1
      // Predicated region
      $region13: #{_backbone_features.1} parent=11 // pred_check
        %p282 = pneg %p77
      $region14: #{_backbone_features.1} parent=11 // pred_check_branch
        %284 = sbr.rel (%p282) target = $region16
      $region15: #{_backbone_features.1} parent=11 // pred_region
        _
      $region16: #{_backbone_features.1} parent=11 // pred_fallthru
        _
      // Predicated region
      $region17: #{_backbone_features.1} parent=11 // pred_check
        %p285 = pneg %p98
      $region18: #{_backbone_features.1} parent=11 // pred_check_branch
        %287 = sbr.rel (%p285) target = $region20
      $region19: #{_backbone_features.1} parent=11 // pred_region
        _
      $region20: #{_backbone_features.1} parent=11 // pred_fallthru
        _
      // Predicated region
      $region21: #{_backbone_features.1} parent=11 // pred_check
        %p288 = pneg %p145
      $region22: #{_backbone_features.1} parent=11 // pred_check_branch
        %290 = sbr.rel (%p288) target = $region24
      $region23: #{_backbone_features.1} parent=11 // pred_region
        _
      $region24: #{_backbone_features.1} parent=11 // pred_fallthru
        _
      // Predicated region
      $region25: #{_backbone_features.1} parent=11 // pred_check
        %p291 = pneg %p166
      $region26: #{_backbone_features.1} parent=11 // pred_check_branch
        %293 = sbr.rel (%p291) target = $region28
      $region27: #{_backbone_features.1} parent=11 // pred_region
        _
      $region28: #{_backbone_features.1} parent=11 // pred_fallthru
        _
      // Predicated region
      $region29: #{_backbone_features.1} parent=11 // pred_check
        %p294 = pneg %p187
      $region30: #{_backbone_features.1} parent=11 // pred_check_branch
        %296 = sbr.rel (%p294) target = $region32
      $region31: #{_backbone_features.1} parent=11 // pred_region
        _
      $region32: #{_backbone_features.1} parent=11 // pred_fallthru
        _
    $region12: #{_backbone_features.1} parent=5 // pred_fallthru
      _
    %p297 = scmp.lt.s32.totalorder %s16, 8
    // Predicated region
    $region33: #{_backbone_features.1} parent=5 // pred_check
      %p298 = pneg %p297
    $region34: #{_backbone_features.1} parent=5 // pred_check_branch
      %300 = sbr.rel (%p298) target = $region36
    $region35: #{_backbone_features.1} parent=5 // pred_region
      // Predicated region
      $region37: #{_backbone_features.1} parent=35 // pred_check
        %p301 = pneg %p50
      $region38: #{_backbone_features.1} parent=35 // pred_check_branch
        %303 = sbr.rel (%p301) target = $region40
      $region39: #{_backbone_features.1} parent=35 // pred_region
        %s304 = smul.u32 2, %s24
        %p305 = scmp.lt.s32.totalorder %s23, 1
        %s306 = scalar_select %p305, %s23, 1
        %p307 = scmp.lt.s32.totalorder %s304, 7
        %s308 = scalar_select %p307, %s304, 7
        %s309 = smul.addr %s306, 8
        %s310 = sadd.s32 %s308, %s309
        %s311 = smul.addr %s310, 4
        %s312 = scalar_lea.vmem %s0, %s311
        %s313 = smul.u32 2, %s24
      $region40: #{_backbone_features.1} parent=35 // pred_fallthru
        _
      // Predicated region
      $region41: #{_backbone_features.1} parent=35 // pred_check
        %p314 = pneg %p118
      $region42: #{_backbone_features.1} parent=35 // pred_check_branch
        %316 = sbr.rel (%p314) target = $region44
      $region43: #{_backbone_features.1} parent=35 // pred_region
        %p317 = scmp.lt.s32.totalorder %s24, 3
        %s318 = scalar_select %p317, %s24, 3
        %s319 = smul.addr %s318, 16
        %s320 = smul.addr %s319, 4
        %s321 = scalar_lea.vmem %s3, %s320
      $region44: #{_backbone_features.1} parent=35 // pred_fallthru
        _
    $region36: #{_backbone_features.1} parent=5 // pred_fallthru
      _
    %p322 = scmp.le.s32.totalorder 1, %s16
    %p323 = scmp.lt.s32.totalorder %s16, 9
    %p324 = pnand %p322, %p323
    %p325 = pneg %p324
    // Predicated region
    $region45: #{_backbone_features.1} parent=5 // pred_check
      _
    $region46: #{_backbone_features.1} parent=5 // pred_check_branch
      %327 = sbr.rel (%p324) target = $region48
    $region47: #{_backbone_features.1} parent=5 // pred_region
      %s328 = ssub.s32 %s16, 1
      %s329 = smul.u32 2, %s26
      %p330 = scmp.lt.s32.totalorder %s25, 1
      %s331 = scalar_select %p330, %s25, 1
      %p332 = scmp.lt.s32.totalorder %s329, 7
      %s333 = scalar_select %p332, %s329, 7
      %s334 = smul.addr %s331, 8
      %s335 = sadd.s32 %s333, %s334
      %s336 = smul.addr %s335, 4
      %s337 = scalar_lea.vmem %s0, %s336
      %p338 = pneg %p56
      %p339 = pneg %p53
      %p340 = pneg %p77
      %p341 = pneg %p74
      %p342 = pneg %p98
      %p343 = pneg %p95
      %p344 = scmp.lt.s32.totalorder %s26, 3
      %s345 = scalar_select %p344, %s26, 3
      %s346 = smul.addr %s345, 16
      %s347 = smul.addr %s346, 4
      %s348 = scalar_lea.vmem %s3, %s347
      %p349 = pneg %p124
      %p350 = pneg %p121
      %p351 = pneg %p145
      %p352 = pneg %p142
      %p353 = pneg %p166
      %p354 = pneg %p163
      %p355 = pneg %p187
      %p356 = pneg %p184
      %p357 = pneg %p215
      %p358 = pneg %p212
      %s359 = smul.u32 2, %s26
      %p360 = scmp.lt.s32.totalorder %s25, 1
      %s361 = scalar_select %p360, %s25, 1
      %p362 = scmp.lt.s32.totalorder %s359, 7
      %s363 = scalar_select %p362, %s359, 7
      %s364 = smul.addr %s361, 8
      %s365 = sadd.s32 %s363, %s364
      %s366 = smul.addr %s365, 4
      %s367 = scalar_lea.vmem %s7, %s366
      %p368 = pneg %p241
      %p369 = pneg %p238
      %p370 = scmp.lt.s32.totalorder %s25, 1
      %s371 = scalar_select %p370, %s25, 1
      %s372 = smul.addr %s371, 2
      %s373 = smul.addr %s372, 4
      %s374 = scalar_lea.vmem %s8, %s373
      %p375 = pneg %p267
      %p376 = pneg %p264
      %p377 = scmp.lt.s32.totalorder %s25, 1
      %s378 = scalar_select %p377, %s25, 1
      %s379 = smul.addr %s378, 2
      %s380 = scalar_lea.vmem %s9, %s379
      %s381 = smul.u32 2, %s26
      %p382 = scmp.lt.s32.totalorder %s25, 1
      %s383 = scalar_select %p382, %s25, 1
      %p384 = scmp.lt.s32.totalorder %s381, 7
      %s385 = scalar_select %p384, %s381, 7
      %s386 = smul.addr %s383, 8
      %s387 = sadd.s32 %s385, %s386
      %s388 = smul.addr %s387, 4
      %s389 = scalar_lea.vmem %s0, %s388
      %s390 = smul.u32 2, %s26
      %p391 = scmp.lt.s32.totalorder %s26, 3
      %s392 = scalar_select %p391, %s26, 3
      %s393 = smul.addr %s392, 16
      %s394 = smul.addr %s393, 4
      %s395 = scalar_lea.vmem %s3, %s394
      %s396 = smul.u32 2, %s26
      %p397 = scmp.lt.s32.totalorder %s25, 1
      %s398 = scalar_select %p397, %s25, 1
      %p399 = scmp.lt.s32.totalorder %s396, 7
      %s400 = scalar_select %p399, %s396, 7
      %s401 = smul.addr %s398, 8
      %s402 = sadd.s32 %s400, %s401
      %s403 = smul.addr %s402, 4
      %s404 = scalar_lea.vmem %s7, %s403
      %s405 = smul.u32 2, %s26
      %p406 = scmp.lt.s32.totalorder %s25, 1
      %s407 = scalar_select %p406, %s25, 1
      %s408 = smul.addr %s407, 2
      %s409 = smul.addr %s408, 4
      %s410 = scalar_lea.vmem %s8, %s409
      %p411 = scmp.lt.s32.totalorder %s25, 1
      %s412 = scalar_select %p411, %s25, 1
      %s413 = smul.addr %s412, 2
      %s414 = scalar_lea.vmem %s9, %s413
      %v416 = vld [vmem:[%s389] sm:$0xf]
      %v417 = vld [vmem:[%s389 + $0x4] sm:$0xf]
      %v418 = vld [vmem:[%s1] sm:$0xf]
      %v419 = vld [vmem:[%s1 + $0x4] sm:$0xf]
      %v420 = vld [vmem:[%s2] sm:$0x1]
      %v422 = vlaneseq
      %v423 = vshrl.u32 %v422, 7
      %v424 = vsub.s32 0, %v423
      %v425 = vrot.slane %v420, %v424
      %v429 = vunpack.c.l.b16 %v416
      %v430 = vunpack.c.l.b16 %v417
      %v431 = vpack.c.b16 %v430, %v429
      %v434 = vunpack.c.l.b16 %v418
      %v435 = vunpack.c.l.b16 %v419
      %v436 = vpack.c.b16 %v435, %v434
      %vm438 = vcmask 130048
      %v440 = vsel %vm438, %v431, 0
      %442 = vmatprep.subr.bf16.mxu0 0
      %443 = vmatpush1.bf16.msra.mxu0 0
      %444 = vmatprep.subr.bf16.mxu0 0
      %445 = vmatpush1.bf16.msra.mxu0 0
      %446 = vmatprep.subr.bf16.mxu0 0
      %447 = vmatpush1.bf16.msra.mxu0 0
      %448 = vmatprep.subr.bf16.mxu0 0
      %449 = vmatpush1.bf16.msra.mxu0 0
      %450 = vmatprep.subr.bf16.mxu0 0
      %451 = vmatpush1.bf16.msra.mxu0 0
      %452 = vmatprep.subr.bf16.mxu0 0
      %453 = vmatpush1.bf16.msra.mxu0 0
      %454 = vmatprep.subr.bf16.mxu0 0
      %455 = vmatpush1.bf16.msra.mxu0 0
      %456 = vmatprep.subr.bf16.mxu0 0
      %457 = vmatpush1.bf16.msra.mxu0 %v436
      %458 = vmatprep.subr.bf16.mxu0 0
      %459 = vmatpush2.bf16.msra.mxu0 0
      %460 = vmatprep.subr.bf16.mxu0 0
      %461 = vmatpush2.bf16.msra.mxu0 0
      %462 = vmatprep.subr.bf16.mxu0 0
      %463 = vmatpush2.bf16.msra.mxu0 0
      %464 = vmatprep.subr.bf16.mxu0 0
      %465 = vmatpush2.bf16.msra.mxu0 0
      %466 = vmatprep.subr.bf16.mxu0 0
      %467 = vmatpush2.bf16.msra.mxu0 0
      %468 = vmatprep.subr.bf16.mxu0 0
      %469 = vmatpush2.bf16.msra.mxu0 0
      %470 = vmatprep.subr.bf16.mxu0 0
      %471 = vmatpush2.bf16.msra.mxu0 0
      %472 = vmatprep.subr.bf16.mxu0 0
      %473 = vmatpush2.bf16.msra.mxu0 0
      %474 = vmatprep.mubr.bf16.mxu0 0
      %475 = vmatmul.mubr.bf16.gmra.mxu0 %v440
      %v476 = vpop.f32.mrf.mxu0
      %v477 = vadd.f32 %v425, %v476
      %v478 = vpop.f32.mrf.mxu0
      %v479 = vpop.f32.mrf.mxu0
      %v480 = vadd.f32 %v425, %v479
      %v481 = vpop.f32.mrf.mxu0
      %482 = vdwg.mxu0
      %v483 = vmax.f32 %v477, 0.0
      %v484 = vmax.f32 %v480, 0.0
      %v485 = vpack.c.bf16 %v484, %v483
      %v487 = vunpack.c.l.b16 %v485
      %v488 = vunpack.c.h.b16 %v485
      %v489 = vpack.c.b16 %v487, %v487
      %v490 = vpack.c.b16 %v488, %v488
      %493 = vst [vmem:[%s404] sm:$0xf] %v489
      %494 = vst [vmem:[%s404 + $0x4] sm:$0xf] %v490
      %v495 = vld [vmem:[%s395] sm:$0xf]
      %v496 = vld [vmem:[%s395 + $0x4] sm:$0xf]
      %v497 = vld [vmem:[%s395 + $0x8] sm:$0xf]
      %v498 = vld [vmem:[%s395 + $0xc] sm:$0xf]
      %v499 = vld [vmem:[%s395 + $0x10] sm:$0xf]
      %v500 = vld [vmem:[%s395 + $0x14] sm:$0xf]
      %v501 = vld [vmem:[%s395 + $0x18] sm:$0xf]
      %v502 = vld [vmem:[%s395 + $0x1c] sm:$0xf]
      %v503 = vld [vmem:[%s395 + $0x20] sm:$0xf]
      %v504 = vld [vmem:[%s395 + $0x24] sm:$0xf]
      %v505 = vld [vmem:[%s395 + $0x28] sm:$0xf]
      %v506 = vld [vmem:[%s395 + $0x2c] sm:$0xf]
      %v507 = vld [vmem:[%s395 + $0x30] sm:$0xf]
      %v508 = vld [vmem:[%s395 + $0x34] sm:$0xf]
      %v509 = vld [vmem:[%s395 + $0x38] sm:$0xf]
      %v510 = vld [vmem:[%s395 + $0x3c] sm:$0xf]
      %v527 = vunpack.c.l.b16 %v495
      %v528 = vunpack.c.l.b16 %v496
      %v529 = vunpack.c.l.b16 %v497
      %v530 = vunpack.c.l.b16 %v498
      %v531 = vunpack.c.l.b16 %v499
      %v532 = vunpack.c.l.b16 %v500
      %v533 = vunpack.c.l.b16 %v501
      %v534 = vunpack.c.l.b16 %v502
      %v535 = vunpack.c.l.b16 %v503
      %v536 = vunpack.c.l.b16 %v504
      %v537 = vunpack.c.l.b16 %v505
      %v538 = vunpack.c.l.b16 %v506
      %v539 = vunpack.c.l.b16 %v507
      %v540 = vunpack.c.l.b16 %v508
      %v541 = vunpack.c.l.b16 %v509
      %v542 = vunpack.c.l.b16 %v510
      %v543 = vpack.c.b16 %v528, %v527
      %v544 = vpack.c.b16 %v530, %v529
      %v545 = vpack.c.b16 %v532, %v531
      %v546 = vpack.c.b16 %v534, %v533
      %v547 = vpack.c.b16 %v536, %v535
      %v548 = vpack.c.b16 %v538, %v537
      %v549 = vpack.c.b16 %v540, %v539
      %v550 = vpack.c.b16 %v542, %v541
      %559 = vmatprep.subr.bf16.mxu0 0
      %560 = vmatpush1.bf16.msra.mxu0 %v550
      %561 = vmatprep.subr.bf16.mxu0 0
      %562 = vmatpush1.bf16.msra.mxu0 %v549
      %563 = vmatprep.subr.bf16.mxu0 0
      %564 = vmatpush1.bf16.msra.mxu0 %v548
      %565 = vmatprep.subr.bf16.mxu0 0
      %566 = vmatpush1.bf16.msra.mxu0 %v547
      %567 = vmatprep.subr.bf16.mxu0 0
      %568 = vmatpush1.bf16.msra.mxu0 %v546
      %569 = vmatprep.subr.bf16.mxu0 0
      %570 = vmatpush1.bf16.msra.mxu0 %v545
      %571 = vmatprep.subr.bf16.mxu0 0
      %572 = vmatpush1.bf16.msra.mxu0 %v544
      %573 = vmatprep.subr.bf16.mxu0 0
      %574 = vmatpush1.bf16.msra.mxu0 %v543
      %575 = vmatprep.subr.bf16.mxu0 0
      %576 = vmatpush2.bf16.msra.mxu0 0
      %577 = vmatprep.subr.bf16.mxu0 0
      %578 = vmatpush2.bf16.msra.mxu0 0
      %579 = vmatprep.subr.bf16.mxu0 0
      %580 = vmatpush2.bf16.msra.mxu0 0
      %581 = vmatprep.subr.bf16.mxu0 0
      %582 = vmatpush2.bf16.msra.mxu0 0
      %583 = vmatprep.subr.bf16.mxu0 0
      %584 = vmatpush2.bf16.msra.mxu0 0
      %585 = vmatprep.subr.bf16.mxu0 0
      %586 = vmatpush2.bf16.msra.mxu0 0
      %587 = vmatprep.subr.bf16.mxu0 0
      %588 = vmatpush2.bf16.msra.mxu0 0
      %589 = vmatprep.subr.bf16.mxu0 0
      %590 = vmatpush2.bf16.msra.mxu0 0
      %591 = vmatprep.mubr.bf16.mxu0 0
      %592 = vmatmul.mubr.bf16.gmra.mxu0 %v485
      %v593 = vpop.f32.mrf.mxu0
      %v594 = vadd.f32 0.0, %v593
      %v595 = vpop.f32.mrf.mxu0
      %v596 = vpop.f32.mrf.mxu0
      %v597 = vadd.f32 0.0, %v596
      %v598 = vpop.f32.mrf.mxu0
      %599 = vdwg.mxu0
      %p600 = scmp.eq.s32.totalorder %s26, 0
      // Predicated region
      $region49: #{_backbone_features.1} parent=47 // pred_check
        %p601 = pneg %p600
      $region50: #{_backbone_features.1} parent=47 // pred_check_branch
        %603 = sbr.rel (%p601) target = $region52
      $region51: #{_backbone_features.1} parent=47 // pred_region
        %v604 = vld [vmem:[%s4] sm:$0x1]
        %v606 = vlaneseq
        %v607 = vshrl.u32 %v606, 7
        %v608 = vsub.s32 0, %v607
        %v609 = vrot.slane %v604, %v608
        %v611 = vadd.f32 %v609, %v594
        %v612 = vadd.f32 %v609, %v597
        %613 = vst [vmem:[#allocation2] sm:$0xff] %v611
        %614 = vst [vmem:[#allocation2 + $0x8] sm:$0xff] %v612
      $region52: #{_backbone_features.1} parent=47 // pred_fallthru
        _
      %p615 = scmp.ne.s32.totalorder %s26, 0
      // Predicated region
      $region53: #{_backbone_features.1} parent=47 // pred_check
        %p616 = pneg %p615
      $region54: #{_backbone_features.1} parent=47 // pred_check_branch
        %618 = sbr.rel (%p616) target = $region56
      $region55: #{_backbone_features.1} parent=47 // pred_region
        %v619 = vld [vmem:[#allocation2] sm:$0xff]
        %v620 = vld [vmem:[#allocation2 + $0x8] sm:$0xff]
        %v621 = vadd.f32 %v619, %v594
        %v622 = vadd.f32 %v620, %v597
        %623 = vst [vmem:[#allocation2] sm:$0xff] %v621
        %624 = vst [vmem:[#allocation2 + $0x8] sm:$0xff] %v622
      $region56: #{_backbone_features.1} parent=47 // pred_fallthru
        _
      %p625 = scmp.eq.s32.totalorder %s26, 3
      // Predicated region
      $region57: #{_backbone_features.1} parent=47 // pred_check
        %p626 = pneg %p625
      $region58: #{_backbone_features.1} parent=47 // pred_check_branch
        %628 = sbr.rel (%p626) target = $region60
      $region59: #{_backbone_features.1} parent=47 // pred_region
        %v629 = vld [vmem:[#allocation2] sm:$0xff]
        %v630 = vld [vmem:[#allocation2 + $0x8] sm:$0xff]
        %v631 = vmax.f32 %v629, 0.0
        %v632 = vmax.f32 %v630, 0.0
        %v633 = vpack.c.bf16 %v632, %v631
        %v635 = vunpack.c.l.b16 %v633
        %v636 = vunpack.c.h.b16 %v633
        %v637 = vpack.c.b16 %v635, %v635
        %v638 = vpack.c.b16 %v636, %v636
        %641 = vst [vmem:[#allocation3] sm:$0xf] %v637
        %642 = vst [vmem:[#allocation3 + $0x4] sm:$0xf] %v638
        %643 = vst [vmem:[%s410] sm:$0xf] %v637
        %644 = vst [vmem:[%s410 + $0x4] sm:$0xf] %v638
        %v645 = vld [vmem:[%s6] sm:$0x1]
        %v646 = vld [vmem:[#allocation3] sm:$0x3]
        %v647 = vld [vmem:[%s5] sm:$0xf]
        %v648 = vld [vmem:[%s5 + $0x4] sm:$0xf]
        %v649 = vld [vmem:[%s5 + $0x8] sm:$0xf]
        %v650 = vld [vmem:[%s5 + $0xc] sm:$0xf]
        %v651 = vld [vmem:[%s5 + $0x10] sm:$0xf]
        %v652 = vld [vmem:[%s5 + $0x14] sm:$0xf]
        %v653 = vld [vmem:[%s5 + $0x18] sm:$0xf]
        %v654 = vld [vmem:[%s5 + $0x1c] sm:$0xf]
        %v655 = vld [vmem:[%s5 + $0x20] sm:$0xf]
        %v656 = vld [vmem:[%s5 + $0x24] sm:$0xf]
        %v657 = vld [vmem:[%s5 + $0x28] sm:$0xf]
        %v658 = vld [vmem:[%s5 + $0x2c] sm:$0xf]
        %v659 = vld [vmem:[%s5 + $0x30] sm:$0xf]
        %v660 = vld [vmem:[%s5 + $0x34] sm:$0xf]
        %v661 = vld [vmem:[%s5 + $0x38] sm:$0xf]
        %v662 = vld [vmem:[%s5 + $0x3c] sm:$0xf]
        %v679 = vunpack.c.l.b16 %v647
        %v680 = vunpack.c.l.b16 %v648
        %v681 = vunpack.c.l.b16 %v649
        %v682 = vunpack.c.l.b16 %v650
        %v683 = vunpack.c.l.b16 %v651
        %v684 = vunpack.c.l.b16 %v652
        %v685 = vunpack.c.l.b16 %v653
        %v686 = vunpack.c.l.b16 %v654
        %v687 = vunpack.c.l.b16 %v655
        %v688 = vunpack.c.l.b16 %v656
        %v689 = vunpack.c.l.b16 %v657
        %v690 = vunpack.c.l.b16 %v658
        %v691 = vunpack.c.l.b16 %v659
        %v692 = vunpack.c.l.b16 %v660
        %v693 = vunpack.c.l.b16 %v661
        %v694 = vunpack.c.l.b16 %v662
        %v695 = vpack.c.b16 %v680, %v679
        %v696 = vpack.c.b16 %v682, %v681
        %v697 = vpack.c.b16 %v684, %v683
        %v698 = vpack.c.b16 %v686, %v685
        %v699 = vpack.c.b16 %v688, %v687
        %v700 = vpack.c.b16 %v690, %v689
        %v701 = vpack.c.b16 %v692, %v691
        %v702 = vpack.c.b16 %v694, %v693
        %711 = vmatprep.subr.bf16.mxu0 0
        %712 = vmatpush1.bf16.msra.mxu0 %v702
        %713 = vmatprep.subr.bf16.mxu0 0
        %714 = vmatpush1.bf16.msra.mxu0 %v701
        %715 = vmatprep.subr.bf16.mxu0 0
        %716 = vmatpush1.bf16.msra.mxu0 %v700
        %717 = vmatprep.subr.bf16.mxu0 0
        %718 = vmatpush1.bf16.msra.mxu0 %v699
        %719 = vmatprep.subr.bf16.mxu0 0
        %720 = vmatpush1.bf16.msra.mxu0 %v698
        %721 = vmatprep.subr.bf16.mxu0 0
        %722 = vmatpush1.bf16.msra.mxu0 %v697
        %723 = vmatprep.subr.bf16.mxu0 0
        %724 = vmatpush1.bf16.msra.mxu0 %v696
        %725 = vmatprep.subr.bf16.mxu0 0
        %726 = vmatpush1.bf16.msra.mxu0 %v695
        %727 = vmatprep.subr.bf16.mxu0 0
        %728 = vmatpush2.bf16.msra.mxu0 0
        %729 = vmatprep.subr.bf16.mxu0 0
        %730 = vmatpush2.bf16.msra.mxu0 0
        %731 = vmatprep.subr.bf16.mxu0 0
        %732 = vmatpush2.bf16.msra.mxu0 0
        %733 = vmatprep.subr.bf16.mxu0 0
        %734 = vmatpush2.bf16.msra.mxu0 0
        %735 = vmatprep.subr.bf16.mxu0 0
        %736 = vmatpush2.bf16.msra.mxu0 0
        %737 = vmatprep.subr.bf16.mxu0 0
        %738 = vmatpush2.bf16.msra.mxu0 0
        %739 = vmatprep.subr.bf16.mxu0 0
        %740 = vmatpush2.bf16.msra.mxu0 0
        %741 = vmatprep.subr.bf16.mxu0 0
        %742 = vmatpush2.bf16.msra.mxu0 0
        %743 = vmatprep.mubr.bf16.mxu0 0
        %744 = vmatmul.mubr.bf16.gmra.mxu0 %v646
        %v745 = vpop.f32.mrf.mxu0
        %v746 = vadd.f32 0.0, %v745
        %v747 = vpop.f32.mrf.mxu0
        %v748 = vpop.f32.mrf.mxu0
        %v749 = vpop.f32.mrf.mxu0
        %750 = vdwg.mxu0
        %v752 = vlaneseq
        %v753 = vshrl.u32 %v752, 7
        %v754 = vsub.s32 0, %v753
        %v755 = vrot.slane %v645, %v754
        %v757 = vadd.f32 %v755, %v746
        %v758 = vld [vmem:[#allocation3] sm:$0xc]
        %s759 = scalar_lea.vmem %s5, 64
        %v760 = vld [vmem:[%s759] sm:$0xf]
        %v761 = vld [vmem:[%s759 + $0x4] sm:$0xf]
        %v762 = vld [vmem:[%s759 + $0x8] sm:$0xf]
        %v763 = vld [vmem:[%s759 + $0xc] sm:$0xf]
        %v764 = vld [vmem:[%s759 + $0x10] sm:$0xf]
        %v765 = vld [vmem:[%s759 + $0x14] sm:$0xf]
        %v766 = vld [vmem:[%s759 + $0x18] sm:$0xf]
        %v767 = vld [vmem:[%s759 + $0x1c] sm:$0xf]
        %v768 = vld [vmem:[%s759 + $0x20] sm:$0xf]
        %v769 = vld [vmem:[%s759 + $0x24] sm:$0xf]
        %v770 = vld [vmem:[%s759 + $0x28] sm:$0xf]
        %v771 = vld [vmem:[%s759 + $0x2c] sm:$0xf]
        %v772 = vld [vmem:[%s759 + $0x30] sm:$0xf]
        %v773 = vld [vmem:[%s759 + $0x34] sm:$0xf]
        %v774 = vld [vmem:[%s759 + $0x38] sm:$0xf]
        %v775 = vld [vmem:[%s759 + $0x3c] sm:$0xf]
        %v777 = vunpack.c.l.b16 %v758
        %v778 = vpack.c.b16 %v777, %v777
        %v779 = vrot.slane %v778, 2
        %v797 = vunpack.c.l.b16 %v760
        %v798 = vunpack.c.l.b16 %v761
        %v799 = vunpack.c.l.b16 %v762
        %v800 = vunpack.c.l.b16 %v763
        %v801 = vunpack.c.l.b16 %v764
        %v802 = vunpack.c.l.b16 %v765
        %v803 = vunpack.c.l.b16 %v766
        %v804 = vunpack.c.l.b16 %v767
        %v805 = vunpack.c.l.b16 %v768
        %v806 = vunpack.c.l.b16 %v769
        %v807 = vunpack.c.l.b16 %v770
        %v808 = vunpack.c.l.b16 %v771
        %v809 = vunpack.c.l.b16 %v772
        %v810 = vunpack.c.l.b16 %v773
        %v811 = vunpack.c.l.b16 %v774
        %v812 = vunpack.c.l.b16 %v775
        %v813 = vpack.c.b16 %v798, %v797
        %v814 = vpack.c.b16 %v800, %v799
        %v815 = vpack.c.b16 %v802, %v801
        %v816 = vpack.c.b16 %v804, %v803
        %v817 = vpack.c.b16 %v806, %v805
        %v818 = vpack.c.b16 %v808, %v807
        %v819 = vpack.c.b16 %v810, %v809
        %v820 = vpack.c.b16 %v812, %v811
        %829 = vmatprep.subr.bf16.mxu0 0
        %830 = vmatpush1.bf16.msra.mxu0 %v820
        %831 = vmatprep.subr.bf16.mxu0 0
        %832 = vmatpush1.bf16.msra.mxu0 %v819
        %833 = vmatprep.subr.bf16.mxu0 0
        %834 = vmatpush1.bf16.msra.mxu0 %v818
        %835 = vmatprep.subr.bf16.mxu0 0
        %836 = vmatpush1.bf16.msra.mxu0 %v817
        %837 = vmatprep.subr.bf16.mxu0 0
        %838 = vmatpush1.bf16.msra.mxu0 %v816
        %839 = vmatprep.subr.bf16.mxu0 0
        %840 = vmatpush1.bf16.msra.mxu0 %v815
        %841 = vmatprep.subr.bf16.mxu0 0
        %842 = vmatpush1.bf16.msra.mxu0 %v814
        %843 = vmatprep.subr.bf16.mxu0 0
        %844 = vmatpush1.bf16.msra.mxu0 %v813
        %845 = vmatprep.subr.bf16.mxu0 0
        %846 = vmatpush2.bf16.msra.mxu0 0
        %847 = vmatprep.subr.bf16.mxu0 0
        %848 = vmatpush2.bf16.msra.mxu0 0
        %849 = vmatprep.subr.bf16.mxu0 0
        %850 = vmatpush2.bf16.msra.mxu0 0
        %851 = vmatprep.subr.bf16.mxu0 0
        %852 = vmatpush2.bf16.msra.mxu0 0
        %853 = vmatprep.subr.bf16.mxu0 0
        %854 = vmatpush2.bf16.msra.mxu0 0
        %855 = vmatprep.subr.bf16.mxu0 0
        %856 = vmatpush2.bf16.msra.mxu0 0
        %857 = vmatprep.subr.bf16.mxu0 0
        %858 = vmatpush2.bf16.msra.mxu0 0
        %859 = vmatprep.subr.bf16.mxu0 0
        %860 = vmatpush2.bf16.msra.mxu0 0
        %861 = vmatprep.mubr.bf16.mxu0 0
        %862 = vmatmul.mubr.bf16.gmra.mxu0 %v779
        %v863 = vpop.f32.mrf.mxu0
        %v864 = vadd.f32 0.0, %v863
        %v865 = vpop.f32.mrf.mxu0
        %v866 = vpop.f32.mrf.mxu0
        %v867 = vpop.f32.mrf.mxu0
        %868 = vdwg.mxu0
        %v869 = vadd.f32 %v757, %v864
        %v870 = vld [vmem:[#allocation3 + $0x4] sm:$0x3]
        %s871 = scalar_lea.vmem %s5, 128
        %v872 = vld [vmem:[%s871] sm:$0xf]
        %v873 = vld [vmem:[%s871 + $0x4] sm:$0xf]
        %v874 = vld [vmem:[%s871 + $0x8] sm:$0xf]
        %v875 = vld [vmem:[%s871 + $0xc] sm:$0xf]
        %v876 = vld [vmem:[%s871 + $0x10] sm:$0xf]
        %v877 = vld [vmem:[%s871 + $0x14] sm:$0xf]
        %v878 = vld [vmem:[%s871 + $0x18] sm:$0xf]
        %v879 = vld [vmem:[%s871 + $0x1c] sm:$0xf]
        %v880 = vld [vmem:[%s871 + $0x20] sm:$0xf]
        %v881 = vld [vmem:[%s871 + $0x24] sm:$0xf]
        %v882 = vld [vmem:[%s871 + $0x28] sm:$0xf]
        %v883 = vld [vmem:[%s871 + $0x2c] sm:$0xf]
        %v884 = vld [vmem:[%s871 + $0x30] sm:$0xf]
        %v885 = vld [vmem:[%s871 + $0x34] sm:$0xf]
        %v886 = vld [vmem:[%s871 + $0x38] sm:$0xf]
        %v887 = vld [vmem:[%s871 + $0x3c] sm:$0xf]
        %v904 = vunpack.c.l.b16 %v872
        %v905 = vunpack.c.l.b16 %v873
        %v906 = vunpack.c.l.b16 %v874
        %v907 = vunpack.c.l.b16 %v875
        %v908 = vunpack.c.l.b16 %v876
        %v909 = vunpack.c.l.b16 %v877
        %v910 = vunpack.c.l.b16 %v878
        %v911 = vunpack.c.l.b16 %v879
        %v912 = vunpack.c.l.b16 %v880
        %v913 = vunpack.c.l.b16 %v881
        %v914 = vunpack.c.l.b16 %v882
        %v915 = vunpack.c.l.b16 %v883
        %v916 = vunpack.c.l.b16 %v884
        %v917 = vunpack.c.l.b16 %v885
        %v918 = vunpack.c.l.b16 %v886
        %v919 = vunpack.c.l.b16 %v887
        %v920 = vpack.c.b16 %v905, %v904
        %v921 = vpack.c.b16 %v907, %v906
        %v922 = vpack.c.b16 %v909, %v908
        %v923 = vpack.c.b16 %v911, %v910
        %v924 = vpack.c.b16 %v913, %v912
        %v925 = vpack.c.b16 %v915, %v914
        %v926 = vpack.c.b16 %v917, %v916
        %v927 = vpack.c.b16 %v919, %v918
        %936 = vmatprep.subr.bf16.mxu0 0
        %937 = vmatpush1.bf16.msra.mxu0 %v927
        %938 = vmatprep.subr.bf16.mxu0 0
        %939 = vmatpush1.bf16.msra.mxu0 %v926
        %940 = vmatprep.subr.bf16.mxu0 0
        %941 = vmatpush1.bf16.msra.mxu0 %v925
        %942 = vmatprep.subr.bf16.mxu0 0
        %943 = vmatpush1.bf16.msra.mxu0 %v924
        %944 = vmatprep.subr.bf16.mxu0 0
        %945 = vmatpush1.bf16.msra.mxu0 %v923
        %946 = vmatprep.subr.bf16.mxu0 0
        %947 = vmatpush1.bf16.msra.mxu0 %v922
        %948 = vmatprep.subr.bf16.mxu0 0
        %949 = vmatpush1.bf16.msra.mxu0 %v921
        %950 = vmatprep.subr.bf16.mxu0 0
        %951 = vmatpush1.bf16.msra.mxu0 %v920
        %952 = vmatprep.subr.bf16.mxu0 0
        %953 = vmatpush2.bf16.msra.mxu0 0
        %954 = vmatprep.subr.bf16.mxu0 0
        %955 = vmatpush2.bf16.msra.mxu0 0
        %956 = vmatprep.subr.bf16.mxu0 0
        %957 = vmatpush2.bf16.msra.mxu0 0
        %958 = vmatprep.subr.bf16.mxu0 0
        %959 = vmatpush2.bf16.msra.mxu0 0
        %960 = vmatprep.subr.bf16.mxu0 0
        %961 = vmatpush2.bf16.msra.mxu0 0
        %962 = vmatprep.subr.bf16.mxu0 0
        %963 = vmatpush2.bf16.msra.mxu0 0
        %964 = vmatprep.subr.bf16.mxu0 0
        %965 = vmatpush2.bf16.msra.mxu0 0
        %966 = vmatprep.subr.bf16.mxu0 0
        %967 = vmatpush2.bf16.msra.mxu0 0
        %968 = vmatprep.mubr.bf16.mxu0 0
        %969 = vmatmul.mubr.bf16.gmra.mxu0 %v870
        %v970 = vpop.f32.mrf.mxu0
        %v971 = vadd.f32 0.0, %v970
        %v972 = vpop.f32.mrf.mxu0
        %v973 = vpop.f32.mrf.mxu0
        %v974 = vpop.f32.mrf.mxu0
        %975 = vdwg.mxu0
        %v976 = vadd.f32 %v869, %v971
        %v977 = vld [vmem:[#allocation3 + $0x4] sm:$0xc]
        %s978 = scalar_lea.vmem %s5, 192
        %v979 = vld [vmem:[%s978] sm:$0xf]
        %v980 = vld [vmem:[%s978 + $0x4] sm:$0xf]
        %v981 = vld [vmem:[%s978 + $0x8] sm:$0xf]
        %v982 = vld [vmem:[%s978 + $0xc] sm:$0xf]
        %v983 = vld [vmem:[%s978 + $0x10] sm:$0xf]
        %v984 = vld [vmem:[%s978 + $0x14] sm:$0xf]
        %v985 = vld [vmem:[%s978 + $0x18] sm:$0xf]
        %v986 = vld [vmem:[%s978 + $0x1c] sm:$0xf]
        %v987 = vld [vmem:[%s978 + $0x20] sm:$0xf]
        %v988 = vld [vmem:[%s978 + $0x24] sm:$0xf]
        %v989 = vld [vmem:[%s978 + $0x28] sm:$0xf]
        %v990 = vld [vmem:[%s978 + $0x2c] sm:$0xf]
        %v991 = vld [vmem:[%s978 + $0x30] sm:$0xf]
        %v992 = vld [vmem:[%s978 + $0x34] sm:$0xf]
        %v993 = vld [vmem:[%s978 + $0x38] sm:$0xf]
        %v994 = vld [vmem:[%s978 + $0x3c] sm:$0xf]
        %v996 = vunpack.c.l.b16 %v977
        %v997 = vpack.c.b16 %v996, %v996
        %v998 = vrot.slane %v997, 2
        %v1016 = vunpack.c.l.b16 %v979
        %v1017 = vunpack.c.l.b16 %v980
        %v1018 = vunpack.c.l.b16 %v981
        %v1019 = vunpack.c.l.b16 %v982
        %v1020 = vunpack.c.l.b16 %v983
        %v1021 = vunpack.c.l.b16 %v984
        %v1022 = vunpack.c.l.b16 %v985
        %v1023 = vunpack.c.l.b16 %v986
        %v1024 = vunpack.c.l.b16 %v987
        %v1025 = vunpack.c.l.b16 %v988
        %v1026 = vunpack.c.l.b16 %v989
        %v1027 = vunpack.c.l.b16 %v990
        %v1028 = vunpack.c.l.b16 %v991
        %v1029 = vunpack.c.l.b16 %v992
        %v1030 = vunpack.c.l.b16 %v993
        %v1031 = vunpack.c.l.b16 %v994
        %v1032 = vpack.c.b16 %v1017, %v1016
        %v1033 = vpack.c.b16 %v1019, %v1018
        %v1034 = vpack.c.b16 %v1021, %v1020
        %v1035 = vpack.c.b16 %v1023, %v1022
        %v1036 = vpack.c.b16 %v1025, %v1024
        %v1037 = vpack.c.b16 %v1027, %v1026
        %v1038 = vpack.c.b16 %v1029, %v1028
        %v1039 = vpack.c.b16 %v1031, %v1030
        %1048 = vmatprep.subr.bf16.mxu0 0
        %1049 = vmatpush1.bf16.msra.mxu0 %v1039
        %1050 = vmatprep.subr.bf16.mxu0 0
        %1051 = vmatpush1.bf16.msra.mxu0 %v1038
        %1052 = vmatprep.subr.bf16.mxu0 0
        %1053 = vmatpush1.bf16.msra.mxu0 %v1037
        %1054 = vmatprep.subr.bf16.mxu0 0
        %1055 = vmatpush1.bf16.msra.mxu0 %v1036
        %1056 = vmatprep.subr.bf16.mxu0 0
        %1057 = vmatpush1.bf16.msra.mxu0 %v1035
        %1058 = vmatprep.subr.bf16.mxu0 0
        %1059 = vmatpush1.bf16.msra.mxu0 %v1034
        %1060 = vmatprep.subr.bf16.mxu0 0
        %1061 = vmatpush1.bf16.msra.mxu0 %v1033
        %1062 = vmatprep.subr.bf16.mxu0 0
        %1063 = vmatpush1.bf16.msra.mxu0 %v1032
        %1064 = vmatprep.subr.bf16.mxu0 0
        %1065 = vmatpush2.bf16.msra.mxu0 0
        %1066 = vmatprep.subr.bf16.mxu0 0
        %1067 = vmatpush2.bf16.msra.mxu0 0
        %1068 = vmatprep.subr.bf16.mxu0 0
        %1069 = vmatpush2.bf16.msra.mxu0 0
        %1070 = vmatprep.subr.bf16.mxu0 0
        %1071 = vmatpush2.bf16.msra.mxu0 0
        %1072 = vmatprep.subr.bf16.mxu0 0
        %1073 = vmatpush2.bf16.msra.mxu0 0
        %1074 = vmatprep.subr.bf16.mxu0 0
        %1075 = vmatpush2.bf16.msra.mxu0 0
        %1076 = vmatprep.subr.bf16.mxu0 0
        %1077 = vmatpush2.bf16.msra.mxu0 0
        %1078 = vmatprep.subr.bf16.mxu0 0
        %1079 = vmatpush2.bf16.msra.mxu0 0
        %1080 = vmatprep.mubr.bf16.mxu0 0
        %1081 = vmatmul.mubr.bf16.gmra.mxu0 %v998
        %v1082 = vpop.f32.mrf.mxu0
        %v1083 = vadd.f32 0.0, %v1082
        %v1084 = vpop.f32.mrf.mxu0
        %v1085 = vpop.f32.mrf.mxu0
        %v1086 = vpop.f32.mrf.mxu0
        %1087 = vdwg.mxu0
        %v1088 = vadd.f32 %v976, %v1083
        %v1089 = vmax.f32 %v1088, 0.0
        %v1090 = vpack.c.bf16 %v1089, %v1089
        %1091 = vst [vmem:[%s414] sm:$0x3] %v1090
      $region60: #{_backbone_features.1} parent=47 // pred_fallthru
        _
      %s1092 = smul.u32 2, %s26
      %p1093 = scmp.lt.s32.totalorder %s25, 1
      %s1094 = scalar_select %p1093, %s25, 1
      %p1095 = scmp.lt.s32.totalorder %s1092, 7
      %s1096 = scalar_select %p1095, %s1092, 7
      %s1097 = smul.addr %s1094, 8
      %s1098 = sadd.s32 %s1096, %s1097
      %s1099 = smul.addr %s1098, 4
      %s1100 = scalar_lea.vmem %s7, %s1099
      %p1101 = scmp.lt.s32.totalorder %s25, 1
      %s1102 = scalar_select %p1101, %s25, 1
      %s1103 = smul.addr %s1102, 2
      %s1104 = smul.addr %s1103, 4
      %s1105 = scalar_lea.vmem %s8, %s1104
      %p1106 = scmp.lt.s32.totalorder %s25, 1
      %s1107 = scalar_select %p1106, %s25, 1
      %s1108 = smul.addr %s1107, 2
      %s1109 = scalar_lea.vmem %s9, %s1108
      // Predicated region
      $region61: #{_backbone_features.1} parent=47 // pred_check
        %p1110 = pneg %p212
      $region62: #{_backbone_features.1} parent=47 // pred_check_branch
        %1112 = sbr.rel (%p1110) target = $region64
      $region63: #{_backbone_features.1} parent=47 // pred_region
        %s1113 = smul.u32 2, %s26
      $region64: #{_backbone_features.1} parent=47 // pred_fallthru
        _
      // Predicated region
      $region65: #{_backbone_features.1} parent=47 // pred_check
        %p1114 = pneg %p238
      $region66: #{_backbone_features.1} parent=47 // pred_check_branch
        %1116 = sbr.rel (%p1114) target = $region68
      $region67: #{_backbone_features.1} parent=47 // pred_region
        _
      $region68: #{_backbone_features.1} parent=47 // pred_fallthru
        _
      // Predicated region
      $region69: #{_backbone_features.1} parent=47 // pred_check
        %p1117 = pneg %p264
      $region70: #{_backbone_features.1} parent=47 // pred_check_branch
        %1119 = sbr.rel (%p1117) target = $region72
      $region71: #{_backbone_features.1} parent=47 // pred_region
        _
      $region72: #{_backbone_features.1} parent=47 // pred_fallthru
        _
    $region48: #{_backbone_features.1} parent=5 // pred_fallthru
      _
    %p1120 = scmp.le.s32.totalorder 2, %s16
    // Predicated region
    $region73: #{_backbone_features.1} parent=5 // pred_check
      %p1121 = pneg %p1120
    $region74: #{_backbone_features.1} parent=5 // pred_check_branch
      %1123 = sbr.rel (%p1121) target = $region76
    $region75: #{_backbone_features.1} parent=5 // pred_region
      %s1124 = ssub.s32 %s16, 2
      // Predicated region
      $region77: #{_backbone_features.1} parent=75 // pred_check
        %p1125 = pneg %p218
      $region78: #{_backbone_features.1} parent=75 // pred_check_branch
        %1127 = sbr.rel (%p1125) target = $region80
      $region79: #{_backbone_features.1} parent=75 // pred_region
        %s1128 = smul.u32 2, %s28
        %p1129 = scmp.lt.s32.totalorder %s27, 1
        %s1130 = scalar_select %p1129, %s27, 1
        %p1131 = scmp.lt.s32.totalorder %s1128, 7
        %s1132 = scalar_select %p1131, %s1128, 7
        %s1133 = smul.addr %s1130, 8
        %s1134 = sadd.s32 %s1132, %s1133
        %s1135 = smul.addr %s1134, 4
        %s1136 = scalar_lea.vmem %s7, %s1135
      $region80: #{_backbone_features.1} parent=75 // pred_fallthru
        _
      // Predicated region
      $region81: #{_backbone_features.1} parent=75 // pred_check
        %p1137 = pneg %p244
      $region82: #{_backbone_features.1} parent=75 // pred_check_branch
        %1139 = sbr.rel (%p1137) target = $region84
      $region83: #{_backbone_features.1} parent=75 // pred_region
        %p1140 = scmp.lt.s32.totalorder %s27, 1
        %s1141 = scalar_select %p1140, %s27, 1
        %s1142 = smul.addr %s1141, 2
        %s1143 = smul.addr %s1142, 4
        %s1144 = scalar_lea.vmem %s8, %s1143
      $region84: #{_backbone_features.1} parent=75 // pred_fallthru
        _
      // Predicated region
      $region85: #{_backbone_features.1} parent=75 // pred_check
        %p1145 = pneg %p270
      $region86: #{_backbone_features.1} parent=75 // pred_check_branch
        %1147 = sbr.rel (%p1145) target = $region88
      $region87: #{_backbone_features.1} parent=75 // pred_region
        %p1148 = scmp.lt.s32.totalorder %s27, 1
        %s1149 = scalar_select %p1148, %s27, 1
        %s1150 = smul.addr %s1149, 2
        %s1151 = scalar_lea.vmem %s9, %s1150
      $region88: #{_backbone_features.1} parent=75 // pred_fallthru
        _
    $region76: #{_backbone_features.1} parent=5 // pred_fallthru
      _
  $region6: #{_backbone_features.1} parent=0 // loop_footer
    %s20 = sadd.s32 1, %s16
  $region7: #{_backbone_features.1} parent=0 // loop_footer_branch
    %15 = sbr.rel target = $region3
  $region8: #{_backbone_features.1} parent=0 // loop_exit
    _

</llo_original>
